<compile_context>
chip_gen: v5e
topology: v5e:2x2
jax: 0.10.0
libtpu: 0.0.40
codegen_flags: <defaults>
</compile_context>

<pallas_src>
import jax
import jax.numpy as jnp
from jax import lax
from jax.experimental import pallas as pl
from jax.experimental.pallas import tpu as pltpu

LN_EPS = 1e-5
INV_SQRT2 = 0.7071067811865476  # 1/sqrt(2), python float (weak-typed)


def entity_projection_kernel(x_ref, w1_ref, b1_ref, g_ref, beta_ref,
                             w2_ref, b2_ref, o_ref):
    # x_ref: (bm, D)  w1_ref: (D, H)  b1/g/beta: (1, H) f32  w2_ref: (H, D_out)
    hidden = w1_ref.shape[1]
    inv_h = 1.0 / hidden

    # ---- Linear 1: native-dtype operands on the MXU, f32 accumulation ----
    h = jnp.dot(x_ref[...], w1_ref[...], preferred_element_type=jnp.float32)
    h = h + b1_ref[...]  # f32 from here on

    # ---- GELU (exact, erf-based; matches torch.nn.GELU default) ----
    h = 0.5 * h * (1.0 + lax.erf(h * INV_SQRT2))

    # ---- Fused LayerNorm over last dim (H), eps=1e-5 ----
    # One pass of stats: sum and sum-of-squares; gamma folded into the scale,
    # (beta - mean*scale) folded into the shift.
    s1 = jnp.sum(h, axis=-1, keepdims=True)
    s2 = jnp.sum(h * h, axis=-1, keepdims=True)
    mean = s1 * inv_h
    var = jnp.maximum(s2 * inv_h - mean * mean, 0.0)
    scale = lax.rsqrt(var + LN_EPS) * g_ref[...]        # (bm, H)
    shift = beta_ref[...] - mean * scale                # (bm, H)
    hn = h * scale + shift

    # ---- Linear 2: feed the MXU in the weight dtype, f32 accumulation ----
    out = jnp.dot(hn.astype(w2_ref.dtype), w2_ref[...],
                  preferred_element_type=jnp.float32)
    out = out + b2_ref[...]
    o_ref[...] = out.astype(o_ref.dtype)


def _round_up(n, k):
    return ((n + k - 1) // k) * k


def entity_projection(x, w1, b1, gamma, beta, w2, b2, *, block_m=256):
    """x: [batch, seq, D] -> [batch, seq, D_out]."""
    batch, seq, d_in = x.shape
    hidden = w1.shape[1]
    d_out = w2.shape[1]
    m = batch * seq

    # Adaptive row tile: big tiles amortize per-grid-step overhead, but never
    # bigger than (rounded-up) M. Keep a multiple of 8 (f32 sublane packing).
    block_m = max(8, min(_round_up(block_m, 8), _round_up(m, 8)))
    m_pad = _round_up(m, block_m)
    grid_m = m_pad // block_m

    x2 = x.reshape(m, d_in)
    if m_pad != m:
        # Zero-pad rows; rows are independent so padded rows are just dropped.
        x2 = jnp.pad(x2, ((0, m_pad - m), (0, 0)))

    # Bias / LayerNorm parameters stay f32 so the VPU/EUP math is f32 even if
    # the stored parameters are bf16.
    b1_2 = b1.reshape(1, hidden).astype(jnp.float32)
    g_2 = gamma.reshape(1, hidden).astype(jnp.float32)
    be_2 = beta.reshape(1, hidden).astype(jnp.float32)
    b2_2 = b2.reshape(1, d_out).astype(jnp.float32)

    out2 = pl.pallas_call(
        entity_projection_kernel,
        out_shape=jax.ShapeDtypeStruct((m_pad, d_out), x.dtype),
        grid_spec=pltpu.PrefetchScalarGridSpec(
            num_scalar_prefetch=0,
            grid=(grid_m,),
            in_specs=[
                pl.BlockSpec((block_m, d_in), lambda i: (i, 0)),   # x rows
                pl.BlockSpec((d_in, hidden), lambda i: (0, 0)),    # W1 (const)
                pl.BlockSpec((1, hidden),    lambda i: (0, 0)),    # b1 (const)
                pl.BlockSpec((1, hidden),    lambda i: (0, 0)),    # gamma
                pl.BlockSpec((1, hidden),    lambda i: (0, 0)),    # beta
                pl.BlockSpec((hidden, d_out), lambda i: (0, 0)),   # W2 (const)
                pl.BlockSpec((1, d_out),     lambda i: (0, 0)),    # b2 (const)
            ],
            out_specs=pl.BlockSpec((block_m, d_out), lambda i: (i, 0)),
        ),
        compiler_params=pltpu.CompilerParams(
            dimension_semantics=("parallel",)),  # shards rows across TCs (v7x)
    )(x2, w1, b1_2, g_2, be_2, w2, b2_2)

    if m_pad != m:
        out2 = out2[:m]
    return out2.reshape(batch, seq, d_out)


def reference_jax(x, w1, b1, gamma, beta, w2, b2):
    h = jnp.einsum("bsd,dh->bsh", x, w1) + b1
    h = 0.5 * h * (1.0 + lax.erf(h / jnp.sqrt(2.0)))
    mean = jnp.mean(h, axis=-1, keepdims=True)
    var = jnp.mean((h - mean) ** 2, axis=-1, keepdims=True)
    hn = (h - mean) * lax.rsqrt(var + LN_EPS) * gamma + beta
    return jnp.einsum("bsh,ho->bso", hn, w2) + b2


if __name__ == "__main__":
    # Small shapes consistent with the module: input_dim=32 -> hidden=96 -> output_dim=16
    batch, seq, d_in, d_out = 2, 8, 32, 16
    hidden = int(d_in * 3)

    key = jax.random.PRNGKey(0)
    kx, k1, k2, k3, k4 = jax.random.split(key, 5)

    x = jax.random.normal(kx, (batch, seq, d_in), dtype=jnp.float32)

    # Deterministic parameter init (PyTorch-Linear-like uniform ranges).
    lim1 = 1.0 / (d_in ** 0.5)
    w1 = jax.random.uniform(k1, (d_in, hidden), minval=-lim1, maxval=lim1,
                            dtype=jnp.float32)
    b1 = jax.random.uniform(k2, (hidden,), minval=-lim1, maxval=lim1,
                            dtype=jnp.float32)
    gamma = jnp.ones((hidden,), dtype=jnp.float32)
    beta = jnp.zeros((hidden,), dtype=jnp.float32)
    lim2 = 1.0 / (hidden ** 0.5)
    w2 = jax.random.uniform(k3, (hidden, d_out), minval=-lim2, maxval=lim2,
                            dtype=jnp.float32)
    b2 = jax.random.uniform(k4, (d_out,), minval=-lim2, maxval=lim2,
                            dtype=jnp.float32)

    out = entity_projection(x, w1, b1, gamma, beta, w2, b2)
    out = jax.block_until_ready(out)

    ref = reference_jax(x, w1, b1, gamma, beta, w2, b2)
    assert out.shape == (batch, seq, d_out)
    assert jnp.allclose(out, ref, atol=1e-4, rtol=1e-4), "mismatch vs JAX reference"

    print("KERNEL_OK")
</pallas_src>

<mosaic_0001>
module attributes {stable_mosaic.version = 11 : i64} {
  func.func @entity_projection_kernel(%arg0: i32, %arg1: memref<16x32xf32, #tpu.memory_space<vmem>>, %arg2: memref<32x96xf32, #tpu.memory_space<vmem>>, %arg3: memref<1x96xf32, #tpu.memory_space<vmem>>, %arg4: memref<1x96xf32, #tpu.memory_space<vmem>>, %arg5: memref<1x96xf32, #tpu.memory_space<vmem>>, %arg6: memref<96x16xf32, #tpu.memory_space<vmem>>, %arg7: memref<1x16xf32, #tpu.memory_space<vmem>>, %arg8: memref<16x16xf32, #tpu.memory_space<vmem>>) attributes {dimension_semantics = [#tpu.dimension_semantics<parallel>], iteration_bounds = array<i64: 1>, scalar_prefetch = 0 : i64, scratch_operands = 0 : i64, tpu.core_type = #tpu.core_type<tc>, window_params = [{transform_indices = @transform_0, window_bounds = array<i64: 16, 32>}, {pipeline_mode = #tpu.pipeline_mode<synchronous>, transform_indices = @transform_1, window_bounds = array<i64: 32, 96>}, {pipeline_mode = #tpu.pipeline_mode<synchronous>, transform_indices = @transform_2, window_bounds = array<i64: 1, 96>}, {pipeline_mode = #tpu.pipeline_mode<synchronous>, transform_indices = @transform_3, window_bounds = array<i64: 1, 96>}, {pipeline_mode = #tpu.pipeline_mode<synchronous>, transform_indices = @transform_4, window_bounds = array<i64: 1, 96>}, {pipeline_mode = #tpu.pipeline_mode<synchronous>, transform_indices = @transform_5, window_bounds = array<i64: 96, 16>}, {pipeline_mode = #tpu.pipeline_mode<synchronous>, transform_indices = @transform_6, window_bounds = array<i64: 1, 16>}, {transform_indices = @transform_7, window_bounds = array<i64: 16, 16>}]} {
    %c0 = arith.constant 0 : index
    %c0_0 = arith.constant 0 : index
    %0 = vector.load %arg1[%c0, %c0_0] : memref<16x32xf32, #tpu.memory_space<vmem>>, vector<16x32xf32>
    %c0_1 = arith.constant 0 : index
    %c0_2 = arith.constant 0 : index
    %1 = vector.load %arg2[%c0_1, %c0_2] : memref<32x96xf32, #tpu.memory_space<vmem>>, vector<32x96xf32>
    %cst = arith.constant dense<0.000000e+00> : vector<16x96xf32>
    %2 = tpu.matmul %0, %1, %cst {dimension_numbers = #tpu.dot_dimension_numbers<[1], [0], [0], [1], [0, 0, 1, 1], [], []>} : vector<16x32xf32>, vector<32x96xf32>, vector<16x96xf32> -> vector<16x96xf32>
    %c0_3 = arith.constant 0 : index
    %c0_4 = arith.constant 0 : index
    %3 = vector.load %arg3[%c0_3, %c0_4] : memref<1x96xf32, #tpu.memory_space<vmem>>, vector<1x96xf32>
    %4 = vector.broadcast %3 : vector<1x96xf32> to vector<16x96xf32>
    %5 = arith.addf %2, %4 : vector<16x96xf32>
    %cst_5 = arith.constant 5.000000e-01 : f32
    %6 = vector.broadcast %cst_5 : f32 to vector<16x96xf32>
    %7 = arith.mulf %6, %5 : vector<16x96xf32>
    %cst_6 = arith.constant 0.707106769 : f32
    %8 = vector.broadcast %cst_6 : f32 to vector<16x96xf32>
    %9 = arith.mulf %5, %8 : vector<16x96xf32>
    %10 = math.erf %9 : vector<16x96xf32>
    %cst_7 = arith.constant 1.000000e+00 : f32
    %11 = vector.broadcast %cst_7 : f32 to vector<16x96xf32>
    %12 = arith.addf %11, %10 : vector<16x96xf32>
    %13 = arith.mulf %7, %12 : vector<16x96xf32>
    %cst_8 = arith.constant dense<0.000000e+00> : vector<16xf32>
    %14 = vector.multi_reduction <add>, %13, %cst_8 [1] : vector<16x96xf32> to vector<16xf32>
    %15 = vector.shape_cast %14 : vector<16xf32> to vector<16x1xf32>
    %16 = arith.mulf %13, %13 : vector<16x96xf32>
    %cst_9 = arith.constant dense<0.000000e+00> : vector<16xf32>
    %17 = vector.multi_reduction <add>, %16, %cst_9 [1] : vector<16x96xf32> to vector<16xf32>
    %18 = vector.shape_cast %17 : vector<16xf32> to vector<16x1xf32>
    %cst_10 = arith.constant 0.010416667 : f32
    %19 = vector.broadcast %cst_10 : f32 to vector<16x1xf32>
    %20 = arith.mulf %15, %19 : vector<16x1xf32>
    %cst_11 = arith.constant 0.010416667 : f32
    %21 = vector.broadcast %cst_11 : f32 to vector<16x1xf32>
    %22 = arith.mulf %18, %21 : vector<16x1xf32>
    %23 = arith.mulf %20, %20 : vector<16x1xf32>
    %24 = arith.subf %22, %23 : vector<16x1xf32>
    %cst_12 = arith.constant 0.000000e+00 : f32
    %25 = vector.broadcast %cst_12 : f32 to vector<16x1xf32>
    %26 = arith.maximumf %24, %25 : vector<16x1xf32>
    %cst_13 = arith.constant 9.99999974E-6 : f32
    %27 = vector.broadcast %cst_13 : f32 to vector<16x1xf32>
    %28 = arith.addf %26, %27 : vector<16x1xf32>
    %29 = math.rsqrt %28 : vector<16x1xf32>
    %c0_14 = arith.constant 0 : index
    %c0_15 = arith.constant 0 : index
    %30 = vector.load %arg4[%c0_14, %c0_15] : memref<1x96xf32, #tpu.memory_space<vmem>>, vector<1x96xf32>
    %31 = vector.broadcast %29 : vector<16x1xf32> to vector<16x96xf32>
    %32 = vector.broadcast %30 : vector<1x96xf32> to vector<16x96xf32>
    %33 = arith.mulf %31, %32 : vector<16x96xf32>
    %c0_16 = arith.constant 0 : index
    %c0_17 = arith.constant 0 : index
    %34 = vector.load %arg5[%c0_16, %c0_17] : memref<1x96xf32, #tpu.memory_space<vmem>>, vector<1x96xf32>
    %35 = vector.broadcast %20 : vector<16x1xf32> to vector<16x96xf32>
    %36 = arith.mulf %35, %33 : vector<16x96xf32>
    %37 = vector.broadcast %34 : vector<1x96xf32> to vector<16x96xf32>
    %38 = arith.subf %37, %36 : vector<16x96xf32>
    %39 = arith.mulf %13, %33 : vector<16x96xf32>
    %40 = arith.addf %39, %38 : vector<16x96xf32>
    %c0_18 = arith.constant 0 : index
    %c0_19 = arith.constant 0 : index
    %41 = vector.load %arg6[%c0_18, %c0_19] : memref<96x16xf32, #tpu.memory_space<vmem>>, vector<96x16xf32>
    %cst_20 = arith.constant dense<0.000000e+00> : vector<16x16xf32>
    %42 = tpu.matmul %40, %41, %cst_20 {dimension_numbers = #tpu.dot_dimension_numbers<[1], [0], [0], [1], [0, 0, 1, 1], [], []>} : vector<16x96xf32>, vector<96x16xf32>, vector<16x16xf32> -> vector<16x16xf32>
    %c0_21 = arith.constant 0 : index
    %c0_22 = arith.constant 0 : index
    %43 = vector.load %arg7[%c0_21, %c0_22] : memref<1x16xf32, #tpu.memory_space<vmem>>, vector<1x16xf32>
    %44 = vector.broadcast %43 : vector<1x16xf32> to vector<16x16xf32>
    %45 = arith.addf %42, %44 : vector<16x16xf32>
    %c0_23 = arith.constant 0 : index
    %c0_24 = arith.constant 0 : index
    %46 = vector.load %arg8[%c0_23, %c0_24] : memref<16x16xf32, #tpu.memory_space<vmem>>, vector<16x16xf32>
    tpu.vector_store %arg8[%c0_23, %c0_24], %45 {strides = array<i32>} : memref<16x16xf32, #tpu.memory_space<vmem>>, vector<16x16xf32>,
    return
  }
  func.func @transform_0(%arg0: i32) -> (i32, i32) {
    %c0_i32 = arith.constant 0 : i32
    %c0_i32_0 = arith.constant 0 : i32
    return %arg0, %c0_i32 : i32, i32
  }
  func.func @transform_1(%arg0: i32) -> (i32, i32) {
    %c0_i32 = arith.constant 0 : i32
    %c0_i32_0 = arith.constant 0 : i32
    %c0_i32_1 = arith.constant 0 : i32
    return %c0_i32, %c0_i32_0 : i32, i32
  }
  func.func @transform_2(%arg0: i32) -> (i32, i32) {
    %c0_i32 = arith.constant 0 : i32
    %c0_i32_0 = arith.constant 0 : i32
    %c0_i32_1 = arith.constant 0 : i32
    return %c0_i32, %c0_i32_0 : i32, i32
  }
  func.func @transform_3(%arg0: i32) -> (i32, i32) {
    %c0_i32 = arith.constant 0 : i32
    %c0_i32_0 = arith.constant 0 : i32
    %c0_i32_1 = arith.constant 0 : i32
    return %c0_i32, %c0_i32_0 : i32, i32
  }
  func.func @transform_4(%arg0: i32) -> (i32, i32) {
    %c0_i32 = arith.constant 0 : i32
    %c0_i32_0 = arith.constant 0 : i32
    %c0_i32_1 = arith.constant 0 : i32
    return %c0_i32, %c0_i32_0 : i32, i32
  }
  func.func @transform_5(%arg0: i32) -> (i32, i32) {
    %c0_i32 = arith.constant 0 : i32
    %c0_i32_0 = arith.constant 0 : i32
    %c0_i32_1 = arith.constant 0 : i32
    return %c0_i32, %c0_i32_0 : i32, i32
  }
  func.func @transform_6(%arg0: i32) -> (i32, i32) {
    %c0_i32 = arith.constant 0 : i32
    %c0_i32_0 = arith.constant 0 : i32
    %c0_i32_1 = arith.constant 0 : i32
    return %c0_i32, %c0_i32_0 : i32, i32
  }
  func.func @transform_7(%arg0: i32) -> (i32, i32) {
    %c0_i32 = arith.constant 0 : i32
    %c0_i32_0 = arith.constant 0 : i32
    return %arg0, %c0_i32 : i32, i32
  }
}

</mosaic_0001>

<llo_original>
// kernel: tpu_custom_call.1
$region0: #{tpu_custom_call.1}
  #allocation0 [shape = 'u32[]', space=smem, size = 0x4, offset = 0x4, fixed_abs, tag = 'smem constant byte address 0x4 - core index']
  #allocation1 [shape = 'u32[72,128]{1,0:T(1,128)}', space=vmem, size = 0x9000, scoped, tag = 'internal scratch']
  %s0 = inlined_call_operand.vmem [shape: f32[16,32], index: 0, kind: input, shape index: {}]
  %s1 = inlined_call_operand.vmem [shape: f32[32,96], index: 1, kind: input, shape index: {}]
  %s2 = inlined_call_operand.vmem [shape: f32[1,96], index: 2, kind: input, shape index: {}]
  %s3 = inlined_call_operand.vmem [shape: f32[1,96], index: 3, kind: input, shape index: {}]
  %s4 = inlined_call_operand.vmem [shape: f32[1,96], index: 4, kind: input, shape index: {}]
  %s5 = inlined_call_operand.vmem [shape: f32[96,16], index: 5, kind: input, shape index: {}]
  %s6 = inlined_call_operand.vmem [shape: f32[1,16], index: 6, kind: input, shape index: {}]
  %s7 = inlined_call_operand.hbm [shape: f32[16,16], index: 7, kind: output, shape index: {}]
  %s8 = sld [smem:[#allocation0]]
  $region38: #{tpu_custom_call.1} parent=0
    _
  %s10 = ssub.s32 1, %s8
  %s11 = scalar_select 0, %s10, %s8
  $region1: #{tpu_custom_call.1} parent=0
    #allocation2 [shape = 'u8[8192]{0}', space=vmem, size = 0x2000, scoped, tag = 'output window, operand 0, single buffered']
    #allocation3 [shape = 's32[1]{0}', space=sflag, size = 0x4, scoped, tag = 'scoped memory for tpu_custom_call.1']
    %12 = vsyncpa [#allocation3], 0
    // Predicated region
    $region2: #{tpu_custom_call.1} parent=1 // pred_check
      _
    $region3: #{tpu_custom_call.1} parent=1 // pred_check_branch
      %14 = sbr.rel (0) target = $region5
    $region4: #{tpu_custom_call.1} parent=1 // pred_region
      _
    $region5: #{tpu_custom_call.1} parent=1 // pred_fallthru
      _
    // Predicated region
    $region6: #{tpu_custom_call.1} parent=1 // pred_check
      _
    $region7: #{tpu_custom_call.1} parent=1 // pred_check_branch
      %16 = sbr.rel (0) target = $region9
    $region8: #{tpu_custom_call.1} parent=1 // pred_region
      _
    $region9: #{tpu_custom_call.1} parent=1 // pred_fallthru
      _
    // Predicated region
    $region10: #{tpu_custom_call.1} parent=1 // pred_check
      _
    $region11: #{tpu_custom_call.1} parent=1 // pred_check_branch
      %18 = sbr.rel (0) target = $region13
    $region12: #{tpu_custom_call.1} parent=1 // pred_region
      _
    $region13: #{tpu_custom_call.1} parent=1 // pred_fallthru
      _
    // Predicated region
    $region14: #{tpu_custom_call.1} parent=1 // pred_check
      _
    $region15: #{tpu_custom_call.1} parent=1 // pred_check_branch
      %20 = sbr.rel (0) target = $region17
    $region16: #{tpu_custom_call.1} parent=1 // pred_region
      _
    $region17: #{tpu_custom_call.1} parent=1 // pred_fallthru
      _
    // Predicated region
    $region18: #{tpu_custom_call.1} parent=1 // pred_check
      _
    $region19: #{tpu_custom_call.1} parent=1 // pred_check_branch
      %22 = sbr.rel (0) target = $region21
    $region20: #{tpu_custom_call.1} parent=1 // pred_region
      _
    $region21: #{tpu_custom_call.1} parent=1 // pred_fallthru
      _
    // Predicated region
    $region22: #{tpu_custom_call.1} parent=1 // pred_check
      _
    $region23: #{tpu_custom_call.1} parent=1 // pred_check_branch
      %24 = sbr.rel (0) target = $region25
    $region24: #{tpu_custom_call.1} parent=1 // pred_region
      _
    $region25: #{tpu_custom_call.1} parent=1 // pred_fallthru
      _
    // Predicated region
    $region26: #{tpu_custom_call.1} parent=1 // pred_check
      _
    $region27: #{tpu_custom_call.1} parent=1 // pred_check_branch
      %26 = sbr.rel (0) target = $region29
    $region28: #{tpu_custom_call.1} parent=1 // pred_region
      _
    $region29: #{tpu_custom_call.1} parent=1 // pred_fallthru
      _
    %v27 = vld [vmem:[%s0] sm:$0xff]
    %v28 = vld [vmem:[%s0 + $0x8] sm:$0xff]
    %v29 = vld [vmem:[%s1] sm:$0xff]
    %v30 = vld [vmem:[%s1 + $0x8] sm:$0xff]
    %v31 = vld [vmem:[%s1 + $0x10] sm:$0xff]
    %v32 = vld [vmem:[%s1 + $0x18] sm:$0xff]
    %v33 = vld [vmem:[%s2] sm:$0x1]
    %v35 = vperm.slane %v33, 0
    %vm37 = vcmask 261120
    %v39 = vsel %vm37, %v27, 0
    %v42 = vsel %vm37, %v28, 0
    %44 = vmatpush.msra.mxu0 0.0
    %45 = vmatpush.msra.mxu0 0.0
    %46 = vmatpush.msra.mxu0 0.0
    %47 = vmatpush.msra.mxu0 0.0
    %48 = vmatpush.msra.mxu0 0.0
    %49 = vmatpush.msra.mxu0 0.0
    %50 = vmatpush.msra.mxu0 0.0
    %51 = vmatpush.msra.mxu0 0.0
    %52 = vmatpush.msra.mxu0 0.0
    %53 = vmatpush.msra.mxu0 0.0
    %54 = vmatpush.msra.mxu0 0.0
    %55 = vmatpush.msra.mxu0 0.0
    %56 = vmatpush.msra.mxu0 %v32
    %57 = vmatpush.msra.mxu0 %v31
    %58 = vmatpush.msra.mxu0 %v30
    %59 = vmatpush.msra.mxu0 %v29
    %60 = vmatmul.f32.gmra.mxu0 %v39
    %v61 = vpop.f32.mrf.mxu0
    %v62 = vadd.f32 %v35, %v61
    %63 = vmatmul.f32.gmra.mxu0 %v42
    %v64 = vpop.f32.mrf.mxu0
    %v65 = vadd.f32 %v35, %v64
    %66 = vdwg.mxu0
    %v67 = vmul.f32 %v62, 0.5
    %v68 = vmul.f32 %v65, 0.5
    %v69 = vmul.f32 %v62, 0.70710677
    %v70 = vmul.f32 %v65, 0.70710677
    %v71 = vmul.f32 %v69, %v69
    %v72 = vmin.f32 16.0, %v71
    %v73 = vmul.f32 %v72, 2.1237322e-06
    %v74 = vadd.f32 %v73, 0.00028619796
    %v75 = vmul.f32 %v72, %v74
    %v76 = vadd.f32 %v75, 0.0036580483
    %v77 = vmul.f32 %v72, %v76
    %v78 = vadd.f32 %v77, 0.05243302
    %v79 = vmul.f32 %v72, %v78
    %v80 = vadd.f32 %v79, 0.18741608
    %v81 = vmul.f32 %v72, %v80
    %v82 = vadd.f32 %v81, 1.1283791
    %v83 = vmul.f32 %v69, %v82
    %v84 = vmul.f32 %v72, 3.8918573e-05
    %v85 = vadd.f32 %v84, 0.001143296
    %v86 = vmul.f32 %v72, %v85
    %v87 = vadd.f32 %v86, 0.014752088
    %v88 = vmul.f32 %v72, %v87
    %v89 = vadd.f32 %v88, 0.112945676
    %v90 = vmul.f32 %v72, %v89
    %v91 = vadd.f32 %v90, 0.4994258
    %v92 = vmul.f32 %v72, %v91
    %v93 = vadd.f32 %v92, 1.0
    %v94 = vrcp.pop %v93
    %v95 = vmul.f32 %v93, %v94
    %v96 = vsub.f32 1.0, %v95
    %v97 = vmul.f32 %v94, %v96
    %v98 = vadd.f32 %v94, %v97
    %vm99 = vweird.f32 %v93
    %vm100 = vweird.f32 %v94
    %vm101 = vmor %vm99, %vm100
    %v102 = vsel %vm101, %v94, %v98
    %v103 = vand.u32 2147483647, %v93
    %vm104 = vcmp.eq.f32.partialorder %v103, 8.507059e+37
    %v105 = vand.u32 %v93, 2147483648
    %v106 = vor.u32 1.1754944e-38, %v105
    %v107 = vsel %vm104, %v106, %v102
    %v108 = vmul.f32 %v83, %v107
    %v109 = vmin.f32 %v108, 1.0
    %v110 = vmax.f32 %v109, -1.0
    %v111 = vmul.f32 %v70, %v70
    %v112 = vmin.f32 16.0, %v111
    %v113 = vmul.f32 %v112, 2.1237322e-06
    %v114 = vadd.f32 %v113, 0.00028619796
    %v115 = vmul.f32 %v112, %v114
    %v116 = vadd.f32 %v115, 0.0036580483
    %v117 = vmul.f32 %v112, %v116
    %v118 = vadd.f32 %v117, 0.05243302
    %v119 = vmul.f32 %v112, %v118
    %v120 = vadd.f32 %v119, 0.18741608
    %v121 = vmul.f32 %v112, %v120
    %v122 = vadd.f32 %v121, 1.1283791
    %v123 = vmul.f32 %v70, %v122
    %v124 = vmul.f32 %v112, 3.8918573e-05
    %v125 = vadd.f32 %v124, 0.001143296
    %v126 = vmul.f32 %v112, %v125
    %v127 = vadd.f32 %v126, 0.014752088
    %v128 = vmul.f32 %v112, %v127
    %v129 = vadd.f32 %v128, 0.112945676
    %v130 = vmul.f32 %v112, %v129
    %v131 = vadd.f32 %v130, 0.4994258
    %v132 = vmul.f32 %v112, %v131
    %v133 = vadd.f32 %v132, 1.0
    %v134 = vrcp.pop %v133
    %v135 = vmul.f32 %v133, %v134
    %v136 = vsub.f32 1.0, %v135
    %v137 = vmul.f32 %v134, %v136
    %v138 = vadd.f32 %v134, %v137
    %vm139 = vweird.f32 %v133
    %vm140 = vweird.f32 %v134
    %vm141 = vmor %vm139, %vm140
    %v142 = vsel %vm141, %v134, %v138
    %v143 = vand.u32 2147483647, %v133
    %vm144 = vcmp.eq.f32.partialorder %v143, 8.507059e+37
    %v145 = vand.u32 %v133, 2147483648
    %v146 = vor.u32 1.1754944e-38, %v145
    %v147 = vsel %vm144, %v146, %v142
    %v148 = vmul.f32 %v123, %v147
    %v149 = vmin.f32 %v148, 1.0
    %v150 = vmax.f32 %v149, -1.0
    %v151 = vadd.f32 %v110, 1.0
    %v152 = vadd.f32 %v150, 1.0
    %v153 = vmul.f32 %v67, %v151
    %v154 = vmul.f32 %v68, %v152
    %vm155 = vcmask 785408
    %v156 = vsel %vm155, %v153, 0.0
    %157 = vadd.xlane.f32.xlu0 %v156
    %v158 = vpop.xlane.xlu0 %157
    %v159 = vsel %vm155, %v154, 0.0
    %160 = vadd.xlane.f32.xlu0 %v159
    %v161 = vpop.xlane.xlu0 %160
    %v162 = vmul.f32 %v153, %v153
    %v163 = vmul.f32 %v154, %v154
    %v164 = vsel %vm155, %v162, 0.0
    %165 = vadd.xlane.f32.xlu0 %v164
    %v166 = vpop.xlane.xlu0 %165
    %v167 = vsel %vm155, %v163, 0.0
    %168 = vadd.xlane.f32.xlu0 %v167
    %v169 = vpop.xlane.xlu0 %168
    %v170 = vmul.f32 %v158, 0.010416667
    %v171 = vmul.f32 %v161, 0.010416667
    %v172 = vmul.f32 %v166, 0.010416667
    %v173 = vmul.f32 %v169, 0.010416667
    %v174 = vmul.f32 %v170, %v170
    %v175 = vmul.f32 %v171, %v171
    %v176 = vsub.f32 %v172, %v174
    %v177 = vsub.f32 %v173, %v175
    %v178 = vmax.f32 %v176, 0.0
    %v179 = vmax.f32 %v177, 0.0
    %v180 = vadd.f32 %v178, 1e-05
    %v181 = vadd.f32 %v179, 1e-05
    %v182 = vrsqrt.pop %v180
    %v183 = vmul.f32 %v182, %v180
    %v184 = vmul.f32 %v183, %v182
    %v185 = vmul.f32 0.5, %v184
    %v186 = vsub.f32 1.5, %v185
    %v187 = vmul.f32 %v182, %v186
    %vm188 = vweird.f32 %v180
    %vm189 = vweird.f32 %v182
    %vm190 = vmor %vm188, %vm189
    %v191 = vsel %vm190, %v182, %v187
    %v192 = vrsqrt.pop %v181
    %v193 = vmul.f32 %v192, %v181
    %v194 = vmul.f32 %v193, %v192
    %v195 = vmul.f32 0.5, %v194
    %v196 = vsub.f32 1.5, %v195
    %v197 = vmul.f32 %v192, %v196
    %vm198 = vweird.f32 %v181
    %vm199 = vweird.f32 %v192
    %vm200 = vmor %vm198, %vm199
    %v201 = vsel %vm200, %v192, %v197
    %v202 = vld [vmem:[%s3] sm:$0x1]
    %v204 = vperm.slane %v202, 0
    %v206 = vmul.f32 %v191, %v204
    %v207 = vmul.f32 %v201, %v204
    %v208 = vld [vmem:[%s4] sm:$0x1]
    %v209 = vmul.f32 %v170, %v206
    %v210 = vmul.f32 %v171, %v207
    %v212 = vperm.slane %v208, 0
    %v214 = vsub.f32 %v212, %v209
    %v215 = vsub.f32 %v212, %v210
    %v216 = vmul.f32 %v153, %v206
    %v217 = vmul.f32 %v154, %v207
    %v218 = vadd.f32 %v216, %v214
    %v219 = vadd.f32 %v217, %v215
    %v220 = vld [vmem:[%s5] sm:$0xff]
    %v221 = vld [vmem:[%s5 + $0x8] sm:$0xff]
    %v222 = vld [vmem:[%s5 + $0x10] sm:$0xff]
    %v223 = vld [vmem:[%s5 + $0x18] sm:$0xff]
    %v224 = vld [vmem:[%s5 + $0x20] sm:$0xff]
    %v225 = vld [vmem:[%s5 + $0x28] sm:$0xff]
    %v226 = vld [vmem:[%s5 + $0x30] sm:$0xff]
    %v227 = vld [vmem:[%s5 + $0x38] sm:$0xff]
    %v228 = vld [vmem:[%s5 + $0x40] sm:$0xff]
    %v229 = vld [vmem:[%s5 + $0x48] sm:$0xff]
    %v230 = vld [vmem:[%s5 + $0x50] sm:$0xff]
    %v231 = vld [vmem:[%s5 + $0x58] sm:$0xff]
    %v232 = vld [vmem:[%s6] sm:$0x1]
    %v234 = vperm.slane %v232, 0
    %v237 = vsel %vm155, %v218, 0
    %v240 = vsel %vm155, %v219, 0
    %242 = vmatpush.msra.mxu0 0.0
    %243 = vmatpush.msra.mxu0 0.0
    %244 = vmatpush.msra.mxu0 0.0
    %245 = vmatpush.msra.mxu0 0.0
    %246 = vmatpush.msra.mxu0 %v231
    %247 = vmatpush.msra.mxu0 %v230
    %248 = vmatpush.msra.mxu0 %v229
    %249 = vmatpush.msra.mxu0 %v228
    %250 = vmatpush.msra.mxu0 %v227
    %251 = vmatpush.msra.mxu0 %v226
    %252 = vmatpush.msra.mxu0 %v225
    %253 = vmatpush.msra.mxu0 %v224
    %254 = vmatpush.msra.mxu0 %v223
    %255 = vmatpush.msra.mxu0 %v222
    %256 = vmatpush.msra.mxu0 %v221
    %257 = vmatpush.msra.mxu0 %v220
    %258 = vmatmul.f32.gmra.mxu0 %v237
    %v259 = vpop.f32.mrf.mxu0
    %v260 = vadd.f32 %v234, %v259
    %261 = vmatmul.f32.gmra.mxu0 %v240
    %v262 = vpop.f32.mrf.mxu0
    %v263 = vadd.f32 %v234, %v262
    %264 = vdwg.mxu0
    %vm265 = vcmask 130048
    %266 = vst.msk [vmem:[#allocation2] sm:$0xff] %vm265, %v260
    %267 = vst.msk [vmem:[#allocation2 + $0x8] sm:$0xff] %vm265, %v263
    // Predicated region
    $region30: #{tpu_custom_call.1} parent=1 // pred_check
      _
    $region31: #{tpu_custom_call.1} parent=1 // pred_check_branch
      %269 = sbr.rel (0) target = $region33
    $region32: #{tpu_custom_call.1} parent=1 // pred_region
      %271 = vsyncadd [#allocation3], 0
      %s272 = sshll.u32 [#allocation2], 4
      %s273 = int_to_ptr.vmem [resolvable:$true] %s272
      %s274 = sshll.u32 %s7, 4
      %s275 = int_to_ptr.hbm [resolvable:$true] %s274
      %280 = dma.vmem_to_hbm [thread:$0]  %s273, 256, %s275, [#allocation3], 128, 128, 8
    $region33: #{tpu_custom_call.1} parent=1 // pred_fallthru
      _
    // Predicated region
    $region34: #{tpu_custom_call.1} parent=1 // pred_check
      _
    $region35: #{tpu_custom_call.1} parent=1 // pred_check_branch
      %282 = sbr.rel (0) target = $region37
    $region36: #{tpu_custom_call.1} parent=1 // pred_region
      %284 = dma.done [#allocation3], 256
    $region37: #{tpu_custom_call.1} parent=1 // pred_fallthru
      _
    %285 = vsyncpa [#allocation3], 1

</llo_original>
